<compile_context>
chip_gen: v6e
topology: v6e:2x2x1
jax: 0.10.0
libtpu: 0.0.40
codegen_flags: <defaults>
</compile_context>

<pallas_src>
import functools

import jax
import jax.numpy as jnp
from jax import lax
from jax.experimental import pallas as pl
from jax.experimental.pallas import tpu as pltpu


def _scheduler_kernel(x_ref,     # VMEM (M, D)  tokens of this batch-block
                      lat_ref,   # VMEM (1, M)  int32 per-token latency (clamped to L)
                      w_ref,     # VMEM (L, D)  mlp_head weight (nn.Linear layout)
                      b_ref,     # VMEM (L, 1)  bias
                      *rest,     # [noise_ref (L, M)] when training, then out_ref (L, M)
                      training):
    if training:
        noise_ref, out_ref = rest
    else:
        (out_ref,) = rest

    # logits^T = W @ x^T + b : one MXU pass per block; result is already
    # lane-dense over tokens (L, M).  (If the real model is bf16, feed x/W as
    # bf16 here with preferred_element_type=f32 -- halves x DMA bytes and
    # doubles MXU rate on v6e/v7x.)
    logits = lax.dot_general(
        w_ref[...], x_ref[...],
        dimension_numbers=(((1,), (1,)), ((), ())),
        preferred_element_type=jnp.float32) + b_ref[...]          # (L, M)

    if training:
        # Gumbel-top-k: top-latency of z = logits + Gumbel reproduces the
        # reference's iterative masked hard Gumbel-softmax selection law.
        z = logits + noise_ref[...]
    else:
        z = logits                                                # eval: top-n of logits

    L, M = z.shape
    lat = lat_ref[...]                                            # (1, M) int32

    # Stable rank of each layer's score within its token column:
    #   rank_j = #{k : z_k > z_j} + #{k < j : z_k == z_j}
    # (first-index tie-break, matching the reference's argmax).  L independent
    # compare/add passes over (L, M) vregs -- no cross-lane reductions and no
    # serial loop-carried chain.
    rows = lax.broadcasted_iota(jnp.int32, (L, 1), 0)             # (L, 1)
    rank = jnp.zeros((L, M), jnp.int32)
    for k in range(L):                                            # static, unrolled
        zk = z[k:k + 1, :]                                        # row k, (1, M)
        beats = (zk > z) | ((zk == z) & (rows > k))
        rank = rank + beats.astype(jnp.int32)

    # Cumulative hard mask: exactly latency[token] ones per token column.
    out_ref[...] = (rank < lat).astype(jnp.float32)


def _default_batch_block(B, S, D, L):
    # Per-step VMEM footprint: double-buffered x tile (2*M*D*4) + noise/out tiles
    # + ~4 live (L, M) f32 temporaries.  Keep it well under the scoped-VMEM
    # default (and v7x's smaller 64 MiB physical VMEM), and prefer >= 2 blocks so
    # the pipeline overlaps DMA with compute and v7x can use both TensorCores.
    budget = 16 * 1024 * 1024
    per_sample = 4 * S * (2 * D + 8 * L)
    bb = max(1, min(B, budget // max(per_sample, 1)))
    if B > 1:
        bb = min(bb, max(1, B // 2))        # at least 2 grid blocks
    while B % bb:                           # must divide B
        bb -= 1
    return bb


def simple_scheduler_forward(x, latency, w, b, *, tau=5.0, training=True,
                             rng_key=None, batch_block=None):
    """Forward pass of SimpleScheduler.

    x:       (B, S, D) float activations
    latency: (B,)      per-sample number of sub-layers to select
    w, b:    (L, D), (L,)  mlp_head weight / bias (natural nn.Linear layout)
    Returns  (B, S, L) cumulative 0/1 mask.

    `tau` never changes the hard forward mask (the rank is scale-invariant); it
    is kept only for API parity.  When training, pass a fresh rng_key per step.
    """
    del tau
    B, S, D = x.shape
    L = w.shape[0]
    if batch_block is None:
        batch_block = _default_batch_block(B, S, D, L)
    assert B % batch_block == 0, "batch_block must divide B"
    n_blocks = B // batch_block
    M_blk = batch_block * S

    # Clamp: more than L rounds would re-pick from an all -inf row (NaN in the
    # reference as well), so latency > L is meaningless.
    lat_cl = jnp.minimum(latency.astype(jnp.int32), jnp.int32(L))
    lat_tok = jnp.broadcast_to(lat_cl[:, None], (B, S)).reshape(n_blocks, 1, M_blk)

    x_r = x.reshape(n_blocks, M_blk, D)      # fold batch-block into the token axis
    b_col = b.reshape(L, 1)

    in_specs = [
        pl.BlockSpec((None, M_blk, D), lambda bi: (bi, 0, 0)),   # x tile
        pl.BlockSpec((None, 1, M_blk), lambda bi: (bi, 0, 0)),   # latency (lane-dense)
        pl.BlockSpec((L, D), lambda bi: (0, 0)),                 # W, resident
        pl.BlockSpec((L, 1), lambda bi: (0, 0)),                 # bias, resident
    ]
    operands = [x_r, lat_tok, w, b_col]

    if training:
        if rng_key is None:
            rng_key = jax.random.PRNGKey(0)  # caller should vary this per step
        # One Gumbel(0,1) per logit, generated host-side (portable: the on-chip
        # PRNG primitives have no interpret/CPU lowering) and already laid out
        # in the kernel's transposed (L, M) block shape.
        noise = jax.random.gumbel(rng_key, (n_blocks, L, M_blk), jnp.float32)
        in_specs.append(pl.BlockSpec((None, L, M_blk), lambda bi: (bi, 0, 0)))
        operands.append(noise)

    kernel = functools.partial(_scheduler_kernel, training=bool(training))

    out_t = pl.pallas_call(
        kernel,
        out_shape=jax.ShapeDtypeStruct((n_blocks, L, M_blk), jnp.float32),
        grid=(n_blocks,),
        in_specs=in_specs,
        out_specs=pl.BlockSpec((None, L, M_blk), lambda bi: (bi, 0, 0)),
        compiler_params=pltpu.CompilerParams(
            dimension_semantics=("parallel",)),   # independent blocks (2 TCs on v7x)
    )(*operands)                                   # (n_blocks, L, M_blk), lane-dense store

    return jnp.transpose(out_t, (0, 2, 1)).reshape(B, S, L)


if __name__ == "__main__":
    key = jax.random.PRNGKey(0)
    B, S, D, L = 2, 8, 32, 16          # batch, seq, dim_in, num_sub_layer
    tau = 5.0

    k1, k2, k3, k_noise = jax.random.split(key, 4)
    x = jax.random.normal(k1, (B, S, D), jnp.float32)

    # nn.Linear-style init: U(-1/sqrt(D), 1/sqrt(D)).
    bound = 1.0 / (D ** 0.5)
    w = jax.random.uniform(k2, (L, D), jnp.float32, -bound, bound)   # (L, D)
    b = jax.random.uniform(k3, (L,), jnp.float32, -bound, bound)

    latency = jnp.array([3, 5], jnp.int32)   # per-sample number of selected layers

    # Pure-JAX reference logits.
    logits_ref = jnp.einsum("bsd,ld->bsl", x, w) + b

    def topn_ok(mask, scores, tol=2e-2):
        """mask picks, per token, a top-n set of `scores` (up to matmul rounding)."""
        sel = mask > 0.5
        lo = jnp.min(jnp.where(sel, scores, jnp.inf), axis=-1)    # worst selected
        hi = jnp.max(jnp.where(sel, -jnp.inf, scores), axis=-1)   # best unselected
        return bool(jnp.all(lo >= hi - tol))

    # --- training path (host-side Gumbel noise, Gumbel-top-k selection) ---
    out_train = simple_scheduler_forward(x, latency, w, b, tau=tau,
                                         training=True, rng_key=k_noise,
                                         batch_block=1)
    out_train = jax.block_until_ready(out_train)

    # Each token row of sample b must select exactly latency[b] distinct layers,
    # and every entry must be exactly 0 or 1.
    counts = jnp.sum(out_train, axis=-1)                               # (B, S)
    expected = jnp.minimum(latency, L)[:, None].astype(jnp.float32)
    assert bool(jnp.all(counts == expected)), counts
    assert bool(jnp.all((out_train == 0.0) | (out_train == 1.0)))

    # Reconstruct the exact noise the wrapper drew (batch_block=1 -> n_blocks=B,
    # M_blk=S) and check the kernel selected the top-latency entries of
    # z = logits + gumbel for every token.
    noise = jax.random.gumbel(k_noise, (B, L, S), jnp.float32)
    z_ref = logits_ref + jnp.transpose(noise, (0, 2, 1))
    assert topn_ok(out_train, z_ref), "training path mismatch vs Gumbel-top-k reference"

    # --- eval path (deterministic masked top-n of the logits) ---
    out_eval = simple_scheduler_forward(x, latency, w, b, tau=tau, training=False)
    out_eval = jax.block_until_ready(out_eval)

    counts_e = jnp.sum(out_eval, axis=-1)
    assert bool(jnp.all(counts_e == expected)), counts_e
    assert bool(jnp.all((out_eval == 0.0) | (out_eval == 1.0)))
    assert topn_ok(out_eval, logits_ref), "eval path mismatch vs top-n reference"

    print("KERNEL_OK")
</pallas_src>

<mosaic_0001>
module attributes {stable_mosaic.version = 11 : i64} {
  func.func @_scheduler_kernel(%arg0: i32, %arg1: memref<1x8x32xf32, #tpu.memory_space<vmem>>, %arg2: memref<1x1x8xi32, #tpu.memory_space<vmem>>, %arg3: memref<16x32xf32, #tpu.memory_space<vmem>>, %arg4: memref<16x1xf32, #tpu.memory_space<vmem>>, %arg5: memref<1x16x8xf32, #tpu.memory_space<vmem>>, %arg6: memref<1x16x8xf32, #tpu.memory_space<vmem>>) attributes {dimension_semantics = [#tpu.dimension_semantics<parallel>], iteration_bounds = array<i64: 2>, scalar_prefetch = 0 : i64, scratch_operands = 0 : i64, tpu.core_type = #tpu.core_type<tc>, window_params = [{transform_indices = @transform_0, window_bounds = array<i64: 1, 8, 32>}, {transform_indices = @transform_1, window_bounds = array<i64: 1, 1, 8>}, {pipeline_mode = #tpu.pipeline_mode<synchronous>, transform_indices = @transform_2, window_bounds = array<i64: 16, 32>}, {pipeline_mode = #tpu.pipeline_mode<synchronous>, transform_indices = @transform_3, window_bounds = array<i64: 16, 1>}, {transform_indices = @transform_4, window_bounds = array<i64: 1, 16, 8>}, {transform_indices = @transform_5, window_bounds = array<i64: 1, 16, 8>}]} {
    %c0 = arith.constant 0 : index
    %c0_0 = arith.constant 0 : index
    %0 = vector.load %arg3[%c0, %c0_0] : memref<16x32xf32, #tpu.memory_space<vmem>>, vector<16x32xf32>
    %c0_1 = arith.constant 0 : index
    %c0_2 = arith.constant 0 : index
    %c0_3 = arith.constant 0 : index
    %1 = vector.load %arg1[%c0_1, %c0_2, %c0_3] : memref<1x8x32xf32, #tpu.memory_space<vmem>>, vector<1x8x32xf32>
    %2 = vector.shape_cast %1 : vector<1x8x32xf32> to vector<8x32xf32>
    %cst = arith.constant dense<0.000000e+00> : vector<16x8xf32>
    %3 = tpu.matmul %0, %2, %cst {dimension_numbers = #tpu.dot_dimension_numbers<[1], [1], [0], [0], [0, 0, 1, 0], [], []>} : vector<16x32xf32>, vector<8x32xf32>, vector<16x8xf32> -> vector<16x8xf32>
    %c0_4 = arith.constant 0 : index
    %c0_5 = arith.constant 0 : index
    %4 = vector.load %arg4[%c0_4, %c0_5] : memref<16x1xf32, #tpu.memory_space<vmem>>, vector<16x1xf32>
    %5 = vector.broadcast %4 : vector<16x1xf32> to vector<16x8xf32>
    %6 = arith.addf %3, %5 : vector<16x8xf32>
    %c0_6 = arith.constant 0 : index
    %c0_7 = arith.constant 0 : index
    %c0_8 = arith.constant 0 : index
    %7 = vector.load %arg5[%c0_6, %c0_7, %c0_8] : memref<1x16x8xf32, #tpu.memory_space<vmem>>, vector<1x16x8xf32>
    %8 = vector.shape_cast %7 : vector<1x16x8xf32> to vector<16x8xf32>
    %9 = arith.addf %6, %8 : vector<16x8xf32>
    %c0_9 = arith.constant 0 : index
    %c0_10 = arith.constant 0 : index
    %c0_11 = arith.constant 0 : index
    %10 = vector.load %arg2[%c0_9, %c0_10, %c0_11] : memref<1x1x8xi32, #tpu.memory_space<vmem>>, vector<1x1x8xi32>
    %11 = vector.shape_cast %10 : vector<1x1x8xi32> to vector<1x8xi32>
    %12 = tpu.iota {dimensions = array<i32: 0>} : vector<16x1xi32>
    %c0_i32 = arith.constant 0 : i32
    %13 = vector.broadcast %c0_i32 : i32 to vector<16x8xi32>
    %14 = vector.extract_strided_slice %9 {offsets = [0, 0], sizes = [1, 8], strides = [1, 1]} : vector<16x8xf32> to vector<1x8xf32>
    %15 = vector.broadcast %14 : vector<1x8xf32> to vector<16x8xf32>
    %16 = arith.cmpf ogt, %15, %9 : vector<16x8xf32>
    %17 = vector.broadcast %14 : vector<1x8xf32> to vector<16x8xf32>
    %18 = arith.cmpf oeq, %17, %9 : vector<16x8xf32>
    %c0_i32_12 = arith.constant 0 : i32
    %19 = vector.broadcast %c0_i32_12 : i32 to vector<16x1xi32>
    %20 = arith.cmpi sgt, %12, %19 : vector<16x1xi32>
    %21 = vector.broadcast %20 : vector<16x1xi1> to vector<16x8xi1>
    %22 = arith.andi %18, %21 : vector<16x8xi1>
    %23 = arith.ori %16, %22 : vector<16x8xi1>
    %24 = arith.extui %23 : vector<16x8xi1> to vector<16x8xi32>
    %25 = arith.addi %13, %24 : vector<16x8xi32>
    %26 = vector.extract_strided_slice %9 {offsets = [1, 0], sizes = [1, 8], strides = [1, 1]} : vector<16x8xf32> to vector<1x8xf32>
    %27 = vector.broadcast %26 : vector<1x8xf32> to vector<16x8xf32>
    %28 = arith.cmpf ogt, %27, %9 : vector<16x8xf32>
    %29 = vector.broadcast %26 : vector<1x8xf32> to vector<16x8xf32>
    %30 = arith.cmpf oeq, %29, %9 : vector<16x8xf32>
    %c1_i32 = arith.constant 1 : i32
    %31 = vector.broadcast %c1_i32 : i32 to vector<16x1xi32>
    %32 = arith.cmpi sgt, %12, %31 : vector<16x1xi32>
    %33 = vector.broadcast %32 : vector<16x1xi1> to vector<16x8xi1>
    %34 = arith.andi %30, %33 : vector<16x8xi1>
    %35 = arith.ori %28, %34 : vector<16x8xi1>
    %36 = arith.extui %35 : vector<16x8xi1> to vector<16x8xi32>
    %37 = arith.addi %25, %36 : vector<16x8xi32>
    %38 = vector.extract_strided_slice %9 {offsets = [2, 0], sizes = [1, 8], strides = [1, 1]} : vector<16x8xf32> to vector<1x8xf32>
    %39 = vector.broadcast %38 : vector<1x8xf32> to vector<16x8xf32>
    %40 = arith.cmpf ogt, %39, %9 : vector<16x8xf32>
    %41 = vector.broadcast %38 : vector<1x8xf32> to vector<16x8xf32>
    %42 = arith.cmpf oeq, %41, %9 : vector<16x8xf32>
    %c2_i32 = arith.constant 2 : i32
    %43 = vector.broadcast %c2_i32 : i32 to vector<16x1xi32>
    %44 = arith.cmpi sgt, %12, %43 : vector<16x1xi32>
    %45 = vector.broadcast %44 : vector<16x1xi1> to vector<16x8xi1>
    %46 = arith.andi %42, %45 : vector<16x8xi1>
    %47 = arith.ori %40, %46 : vector<16x8xi1>
    %48 = arith.extui %47 : vector<16x8xi1> to vector<16x8xi32>
    %49 = arith.addi %37, %48 : vector<16x8xi32>
    %50 = vector.extract_strided_slice %9 {offsets = [3, 0], sizes = [1, 8], strides = [1, 1]} : vector<16x8xf32> to vector<1x8xf32>
    %51 = vector.broadcast %50 : vector<1x8xf32> to vector<16x8xf32>
    %52 = arith.cmpf ogt, %51, %9 : vector<16x8xf32>
    %53 = vector.broadcast %50 : vector<1x8xf32> to vector<16x8xf32>
    %54 = arith.cmpf oeq, %53, %9 : vector<16x8xf32>
    %c3_i32 = arith.constant 3 : i32
    %55 = vector.broadcast %c3_i32 : i32 to vector<16x1xi32>
    %56 = arith.cmpi sgt, %12, %55 : vector<16x1xi32>
    %57 = vector.broadcast %56 : vector<16x1xi1> to vector<16x8xi1>
    %58 = arith.andi %54, %57 : vector<16x8xi1>
    %59 = arith.ori %52, %58 : vector<16x8xi1>
    %60 = arith.extui %59 : vector<16x8xi1> to vector<16x8xi32>
    %61 = arith.addi %49, %60 : vector<16x8xi32>
    %62 = vector.extract_strided_slice %9 {offsets = [4, 0], sizes = [1, 8], strides = [1, 1]} : vector<16x8xf32> to vector<1x8xf32>
    %63 = vector.broadcast %62 : vector<1x8xf32> to vector<16x8xf32>
    %64 = arith.cmpf ogt, %63, %9 : vector<16x8xf32>
    %65 = vector.broadcast %62 : vector<1x8xf32> to vector<16x8xf32>
    %66 = arith.cmpf oeq, %65, %9 : vector<16x8xf32>
    %c4_i32 = arith.constant 4 : i32
    %67 = vector.broadcast %c4_i32 : i32 to vector<16x1xi32>
    %68 = arith.cmpi sgt, %12, %67 : vector<16x1xi32>
    %69 = vector.broadcast %68 : vector<16x1xi1> to vector<16x8xi1>
    %70 = arith.andi %66, %69 : vector<16x8xi1>
    %71 = arith.ori %64, %70 : vector<16x8xi1>
    %72 = arith.extui %71 : vector<16x8xi1> to vector<16x8xi32>
    %73 = arith.addi %61, %72 : vector<16x8xi32>
    %74 = vector.extract_strided_slice %9 {offsets = [5, 0], sizes = [1, 8], strides = [1, 1]} : vector<16x8xf32> to vector<1x8xf32>
    %75 = vector.broadcast %74 : vector<1x8xf32> to vector<16x8xf32>
    %76 = arith.cmpf ogt, %75, %9 : vector<16x8xf32>
    %77 = vector.broadcast %74 : vector<1x8xf32> to vector<16x8xf32>
    %78 = arith.cmpf oeq, %77, %9 : vector<16x8xf32>
    %c5_i32 = arith.constant 5 : i32
    %79 = vector.broadcast %c5_i32 : i32 to vector<16x1xi32>
    %80 = arith.cmpi sgt, %12, %79 : vector<16x1xi32>
    %81 = vector.broadcast %80 : vector<16x1xi1> to vector<16x8xi1>
    %82 = arith.andi %78, %81 : vector<16x8xi1>
    %83 = arith.ori %76, %82 : vector<16x8xi1>
    %84 = arith.extui %83 : vector<16x8xi1> to vector<16x8xi32>
    %85 = arith.addi %73, %84 : vector<16x8xi32>
    %86 = vector.extract_strided_slice %9 {offsets = [6, 0], sizes = [1, 8], strides = [1, 1]} : vector<16x8xf32> to vector<1x8xf32>
    %87 = vector.broadcast %86 : vector<1x8xf32> to vector<16x8xf32>
    %88 = arith.cmpf ogt, %87, %9 : vector<16x8xf32>
    %89 = vector.broadcast %86 : vector<1x8xf32> to vector<16x8xf32>
    %90 = arith.cmpf oeq, %89, %9 : vector<16x8xf32>
    %c6_i32 = arith.constant 6 : i32
    %91 = vector.broadcast %c6_i32 : i32 to vector<16x1xi32>
    %92 = arith.cmpi sgt, %12, %91 : vector<16x1xi32>
    %93 = vector.broadcast %92 : vector<16x1xi1> to vector<16x8xi1>
    %94 = arith.andi %90, %93 : vector<16x8xi1>
    %95 = arith.ori %88, %94 : vector<16x8xi1>
    %96 = arith.extui %95 : vector<16x8xi1> to vector<16x8xi32>
    %97 = arith.addi %85, %96 : vector<16x8xi32>
    %98 = vector.extract_strided_slice %9 {offsets = [7, 0], sizes = [1, 8], strides = [1, 1]} : vector<16x8xf32> to vector<1x8xf32>
    %99 = vector.broadcast %98 : vector<1x8xf32> to vector<16x8xf32>
    %100 = arith.cmpf ogt, %99, %9 : vector<16x8xf32>
    %101 = vector.broadcast %98 : vector<1x8xf32> to vector<16x8xf32>
    %102 = arith.cmpf oeq, %101, %9 : vector<16x8xf32>
    %c7_i32 = arith.constant 7 : i32
    %103 = vector.broadcast %c7_i32 : i32 to vector<16x1xi32>
    %104 = arith.cmpi sgt, %12, %103 : vector<16x1xi32>
    %105 = vector.broadcast %104 : vector<16x1xi1> to vector<16x8xi1>
    %106 = arith.andi %102, %105 : vector<16x8xi1>
    %107 = arith.ori %100, %106 : vector<16x8xi1>
    %108 = arith.extui %107 : vector<16x8xi1> to vector<16x8xi32>
    %109 = arith.addi %97, %108 : vector<16x8xi32>
    %110 = vector.extract_strided_slice %9 {offsets = [8, 0], sizes = [1, 8], strides = [1, 1]} : vector<16x8xf32> to vector<1x8xf32>
    %111 = vector.broadcast %110 : vector<1x8xf32> to vector<16x8xf32>
    %112 = arith.cmpf ogt, %111, %9 : vector<16x8xf32>
    %113 = vector.broadcast %110 : vector<1x8xf32> to vector<16x8xf32>
    %114 = arith.cmpf oeq, %113, %9 : vector<16x8xf32>
    %c8_i32 = arith.constant 8 : i32
    %115 = vector.broadcast %c8_i32 : i32 to vector<16x1xi32>
    %116 = arith.cmpi sgt, %12, %115 : vector<16x1xi32>
    %117 = vector.broadcast %116 : vector<16x1xi1> to vector<16x8xi1>
    %118 = arith.andi %114, %117 : vector<16x8xi1>
    %119 = arith.ori %112, %118 : vector<16x8xi1>
    %120 = arith.extui %119 : vector<16x8xi1> to vector<16x8xi32>
    %121 = arith.addi %109, %120 : vector<16x8xi32>
    %122 = vector.extract_strided_slice %9 {offsets = [9, 0], sizes = [1, 8], strides = [1, 1]} : vector<16x8xf32> to vector<1x8xf32>
    %123 = vector.broadcast %122 : vector<1x8xf32> to vector<16x8xf32>
    %124 = arith.cmpf ogt, %123, %9 : vector<16x8xf32>
    %125 = vector.broadcast %122 : vector<1x8xf32> to vector<16x8xf32>
    %126 = arith.cmpf oeq, %125, %9 : vector<16x8xf32>
    %c9_i32 = arith.constant 9 : i32
    %127 = vector.broadcast %c9_i32 : i32 to vector<16x1xi32>
    %128 = arith.cmpi sgt, %12, %127 : vector<16x1xi32>
    %129 = vector.broadcast %128 : vector<16x1xi1> to vector<16x8xi1>
    %130 = arith.andi %126, %129 : vector<16x8xi1>
    %131 = arith.ori %124, %130 : vector<16x8xi1>
    %132 = arith.extui %131 : vector<16x8xi1> to vector<16x8xi32>
    %133 = arith.addi %121, %132 : vector<16x8xi32>
    %134 = vector.extract_strided_slice %9 {offsets = [10, 0], sizes = [1, 8], strides = [1, 1]} : vector<16x8xf32> to vector<1x8xf32>
    %135 = vector.broadcast %134 : vector<1x8xf32> to vector<16x8xf32>
    %136 = arith.cmpf ogt, %135, %9 : vector<16x8xf32>
    %137 = vector.broadcast %134 : vector<1x8xf32> to vector<16x8xf32>
    %138 = arith.cmpf oeq, %137, %9 : vector<16x8xf32>
    %c10_i32 = arith.constant 10 : i32
    %139 = vector.broadcast %c10_i32 : i32 to vector<16x1xi32>
    %140 = arith.cmpi sgt, %12, %139 : vector<16x1xi32>
    %141 = vector.broadcast %140 : vector<16x1xi1> to vector<16x8xi1>
    %142 = arith.andi %138, %141 : vector<16x8xi1>
    %143 = arith.ori %136, %142 : vector<16x8xi1>
    %144 = arith.extui %143 : vector<16x8xi1> to vector<16x8xi32>
    %145 = arith.addi %133, %144 : vector<16x8xi32>
    %146 = vector.extract_strided_slice %9 {offsets = [11, 0], sizes = [1, 8], strides = [1, 1]} : vector<16x8xf32> to vector<1x8xf32>
    %147 = vector.broadcast %146 : vector<1x8xf32> to vector<16x8xf32>
    %148 = arith.cmpf ogt, %147, %9 : vector<16x8xf32>
    %149 = vector.broadcast %146 : vector<1x8xf32> to vector<16x8xf32>
    %150 = arith.cmpf oeq, %149, %9 : vector<16x8xf32>
    %c11_i32 = arith.constant 11 : i32
    %151 = vector.broadcast %c11_i32 : i32 to vector<16x1xi32>
    %152 = arith.cmpi sgt, %12, %151 : vector<16x1xi32>
    %153 = vector.broadcast %152 : vector<16x1xi1> to vector<16x8xi1>
    %154 = arith.andi %150, %153 : vector<16x8xi1>
    %155 = arith.ori %148, %154 : vector<16x8xi1>
    %156 = arith.extui %155 : vector<16x8xi1> to vector<16x8xi32>
    %157 = arith.addi %145, %156 : vector<16x8xi32>
    %158 = vector.extract_strided_slice %9 {offsets = [12, 0], sizes = [1, 8], strides = [1, 1]} : vector<16x8xf32> to vector<1x8xf32>
    %159 = vector.broadcast %158 : vector<1x8xf32> to vector<16x8xf32>
    %160 = arith.cmpf ogt, %159, %9 : vector<16x8xf32>
    %161 = vector.broadcast %158 : vector<1x8xf32> to vector<16x8xf32>
    %162 = arith.cmpf oeq, %161, %9 : vector<16x8xf32>
    %c12_i32 = arith.constant 12 : i32
    %163 = vector.broadcast %c12_i32 : i32 to vector<16x1xi32>
    %164 = arith.cmpi sgt, %12, %163 : vector<16x1xi32>
    %165 = vector.broadcast %164 : vector<16x1xi1> to vector<16x8xi1>
    %166 = arith.andi %162, %165 : vector<16x8xi1>
    %167 = arith.ori %160, %166 : vector<16x8xi1>
    %168 = arith.extui %167 : vector<16x8xi1> to vector<16x8xi32>
    %169 = arith.addi %157, %168 : vector<16x8xi32>
    %170 = vector.extract_strided_slice %9 {offsets = [13, 0], sizes = [1, 8], strides = [1, 1]} : vector<16x8xf32> to vector<1x8xf32>
    %171 = vector.broadcast %170 : vector<1x8xf32> to vector<16x8xf32>
    %172 = arith.cmpf ogt, %171, %9 : vector<16x8xf32>
    %173 = vector.broadcast %170 : vector<1x8xf32> to vector<16x8xf32>
    %174 = arith.cmpf oeq, %173, %9 : vector<16x8xf32>
    %c13_i32 = arith.constant 13 : i32
    %175 = vector.broadcast %c13_i32 : i32 to vector<16x1xi32>
    %176 = arith.cmpi sgt, %12, %175 : vector<16x1xi32>
    %177 = vector.broadcast %176 : vector<16x1xi1> to vector<16x8xi1>
    %178 = arith.andi %174, %177 : vector<16x8xi1>
    %179 = arith.ori %172, %178 : vector<16x8xi1>
    %180 = arith.extui %179 : vector<16x8xi1> to vector<16x8xi32>
    %181 = arith.addi %169, %180 : vector<16x8xi32>
    %182 = vector.extract_strided_slice %9 {offsets = [14, 0], sizes = [1, 8], strides = [1, 1]} : vector<16x8xf32> to vector<1x8xf32>
    %183 = vector.broadcast %182 : vector<1x8xf32> to vector<16x8xf32>
    %184 = arith.cmpf ogt, %183, %9 : vector<16x8xf32>
    %185 = vector.broadcast %182 : vector<1x8xf32> to vector<16x8xf32>
    %186 = arith.cmpf oeq, %185, %9 : vector<16x8xf32>
    %c14_i32 = arith.constant 14 : i32
    %187 = vector.broadcast %c14_i32 : i32 to vector<16x1xi32>
    %188 = arith.cmpi sgt, %12, %187 : vector<16x1xi32>
    %189 = vector.broadcast %188 : vector<16x1xi1> to vector<16x8xi1>
    %190 = arith.andi %186, %189 : vector<16x8xi1>
    %191 = arith.ori %184, %190 : vector<16x8xi1>
    %192 = arith.extui %191 : vector<16x8xi1> to vector<16x8xi32>
    %193 = arith.addi %181, %192 : vector<16x8xi32>
    %194 = vector.extract_strided_slice %9 {offsets = [15, 0], sizes = [1, 8], strides = [1, 1]} : vector<16x8xf32> to vector<1x8xf32>
    %195 = vector.broadcast %194 : vector<1x8xf32> to vector<16x8xf32>
    %196 = arith.cmpf ogt, %195, %9 : vector<16x8xf32>
    %197 = vector.broadcast %194 : vector<1x8xf32> to vector<16x8xf32>
    %198 = arith.cmpf oeq, %197, %9 : vector<16x8xf32>
    %c15_i32 = arith.constant 15 : i32
    %199 = vector.broadcast %c15_i32 : i32 to vector<16x1xi32>
    %200 = arith.cmpi sgt, %12, %199 : vector<16x1xi32>
    %201 = vector.broadcast %200 : vector<16x1xi1> to vector<16x8xi1>
    %202 = arith.andi %198, %201 : vector<16x8xi1>
    %203 = arith.ori %196, %202 : vector<16x8xi1>
    %204 = arith.extui %203 : vector<16x8xi1> to vector<16x8xi32>
    %205 = arith.addi %193, %204 : vector<16x8xi32>
    %206 = vector.broadcast %11 : vector<1x8xi32> to vector<16x8xi32>
    %207 = arith.cmpi slt, %205, %206 : vector<16x8xi32>
    %208 = arith.extui %207 : vector<16x8xi1> to vector<16x8xi32>
    %209 = arith.sitofp %208 : vector<16x8xi32> to vector<16x8xf32>
    %c0_13 = arith.constant 0 : index
    %c0_14 = arith.constant 0 : index
    %c0_15 = arith.constant 0 : index
    %210 = vector.load %arg6[%c0_13, %c0_14, %c0_15] : memref<1x16x8xf32, #tpu.memory_space<vmem>>, vector<1x16x8xf32>
    %211 = vector.shape_cast %210 : vector<1x16x8xf32> to vector<16x8xf32>
    %212 = vector.shape_cast %209 : vector<16x8xf32> to vector<1x16x8xf32>
    tpu.vector_store %arg6[%c0_13, %c0_14, %c0_15], %212 {strides = array<i32>} : memref<1x16x8xf32, #tpu.memory_space<vmem>>, vector<1x16x8xf32>,
    return
  }
  func.func @transform_0(%arg0: i32) -> (i32, i32, i32) {
    %c0_i32 = arith.constant 0 : i32
    %c0_i32_0 = arith.constant 0 : i32
    %c0_i32_1 = arith.constant 0 : i32
    return %arg0, %c0_i32, %c0_i32_0 : i32, i32, i32
  }
  func.func @transform_1(%arg0: i32) -> (i32, i32, i32) {
    %c0_i32 = arith.constant 0 : i32
    %c0_i32_0 = arith.constant 0 : i32
    %c0_i32_1 = arith.constant 0 : i32
    return %arg0, %c0_i32, %c0_i32_0 : i32, i32, i32
  }
  func.func @transform_2(%arg0: i32) -> (i32, i32) {
    %c0_i32 = arith.constant 0 : i32
    %c0_i32_0 = arith.constant 0 : i32
    %c0_i32_1 = arith.constant 0 : i32
    return %c0_i32, %c0_i32_0 : i32, i32
  }
  func.func @transform_3(%arg0: i32) -> (i32, i32) {
    %c0_i32 = arith.constant 0 : i32
    %c0_i32_0 = arith.constant 0 : i32
    %c0_i32_1 = arith.constant 0 : i32
    return %c0_i32, %c0_i32_0 : i32, i32
  }
  func.func @transform_4(%arg0: i32) -> (i32, i32, i32) {
    %c0_i32 = arith.constant 0 : i32
    %c0_i32_0 = arith.constant 0 : i32
    %c0_i32_1 = arith.constant 0 : i32
    return %arg0, %c0_i32, %c0_i32_0 : i32, i32, i32
  }
  func.func @transform_5(%arg0: i32) -> (i32, i32, i32) {
    %c0_i32 = arith.constant 0 : i32
    %c0_i32_0 = arith.constant 0 : i32
    %c0_i32_1 = arith.constant 0 : i32
    return %arg0, %c0_i32, %c0_i32_0 : i32, i32, i32
  }
}

</mosaic_0001>

<llo_original>
// kernel: tpu_custom_call.1
$region0: #{tpu_custom_call.1}
  #allocation0 [shape = 'u32[]', space=smem, size = 0x4, offset = 0x4, fixed_abs, tag = 'smem constant byte address 0x4 - core index']
  #allocation1 [shape = 'u32[144,128]{1,0:T(1,128)}', space=vmem, size = 0x12000, scoped, tag = 'internal scratch']
  %s0 = inlined_call_operand.vmem [shape: f32[2,8,32], index: 0, kind: input, shape index: {}]
  %s1 = inlined_call_operand.vmem [shape: s32[2,1,8], index: 1, kind: input, shape index: {}]
  %s2 = inlined_call_operand.vmem [shape: f32[16,32], index: 2, kind: input, shape index: {}]
  %s3 = inlined_call_operand.vmem [shape: f32[16,1], index: 3, kind: input, shape index: {}]
  %s4 = inlined_call_operand.vmem [shape: f32[2,16,8], index: 4, kind: input, shape index: {}]
  %s5 = inlined_call_operand.vmem [shape: f32[2,16,8], index: 5, kind: output, shape index: {}]
  %s6 = sld [smem:[#allocation0]]
  $region53: #{tpu_custom_call.1} parent=0
    _
  %s8 = ssub.s32 1, %s6
  %s9 = scalar_select 0, %s8, %s6
  loop: start=0, step=1, limit=4
  $region2: #{tpu_custom_call.1} parent=0 // loop_pre_header
    _
  $region3: #{tpu_custom_call.1} parent=0 // loop_header
    %s11 = sphi 0, %s15
    %p12 = scmp.ge.s32.totalorder %s11, 4
    %s21 = sphi 0, %s23
    %s24 = sphi 0, %s21
    %s25 = sphi 0, %s24
    %s41 = sphi 0, %s25
    %s47 = sphi 0, %s49
    %s50 = sphi 0, %s47
    %s51 = sphi 0, %s50
    %s67 = sphi 0, %s51
    %s71 = sphi 0, %s71
    %s73 = sphi 0, %s71
    %s74 = sphi 0, %s73
    %s88 = sphi 0, %s74
    %s92 = sphi 0, %s92
    %s94 = sphi 0, %s92
    %s95 = sphi 0, %s94
    %s109 = sphi 0, %s95
    %s115 = sphi 0, %s117
    %s118 = sphi 0, %s115
    %s119 = sphi 0, %s118
    %s135 = sphi 0, %s119
    %s141 = sphi 0, %s143
    %s144 = sphi 0, %s141
    %s145 = sphi 0, %s144
    %s161 = sphi 0, %s145
  $region4: #{tpu_custom_call.1} parent=0 // loop_header_branch
    %14 = sbr.rel (%p12) target = $region8
  $region5: #{tpu_custom_call.1} parent=0 // loop_body
    %s16 = ssub.s32 %s11, 1
    %s17 = ssub.s32 %s11, 2
    %s18 = sadd.s32 %s11, 1
    %s19 = ssub.s32 %s11, %s18
    %p20 = scmp.eq.s32.totalorder %s19, 0
    %s22 = sadd.s32 %s21, 1
    %s23 = scalar_select %p20, %s21, %s22
    %p26 = pneg %p20
    %p27 = scmp.eq.s32.totalorder %s11, 1
    %p28 = por %p26, %p27
    %p29 = scmp.ne.s32.totalorder %s21, %s24
    %p30 = scmp.eq.s32.totalorder %s11, 0
    %p31 = por %p29, %p30
    %p32 = scmp.ne.s32.totalorder %s21, %s24
    %p33 = scmp.eq.s32.totalorder %s16, 1
    %p34 = por %p32, %p33
    %p35 = scmp.ne.s32.totalorder %s24, %s25
    %p36 = scmp.eq.s32.totalorder %s16, 0
    %p37 = por %p35, %p36
    %p38 = scmp.ne.s32.totalorder %s24, %s25
    %p39 = scmp.eq.s32.totalorder %s17, 1
    %p40 = por %p38, %p39
    %p42 = scmp.ne.s32.totalorder %s25, %s41
    %p43 = scmp.eq.s32.totalorder %s17, 0
    %p44 = por %p42, %p43
    %s45 = ssub.s32 %s11, %s18
    %p46 = scmp.eq.s32.totalorder %s45, 0
    %s48 = sadd.s32 %s47, 1
    %s49 = scalar_select %p46, %s47, %s48
    %p52 = pneg %p46
    %p53 = scmp.eq.s32.totalorder %s11, 1
    %p54 = por %p52, %p53
    %p55 = scmp.ne.s32.totalorder %s47, %s50
    %p56 = scmp.eq.s32.totalorder %s11, 0
    %p57 = por %p55, %p56
    %p58 = scmp.ne.s32.totalorder %s47, %s50
    %p59 = scmp.eq.s32.totalorder %s16, 1
    %p60 = por %p58, %p59
    %p61 = scmp.ne.s32.totalorder %s50, %s51
    %p62 = scmp.eq.s32.totalorder %s16, 0
    %p63 = por %p61, %p62
    %p64 = scmp.ne.s32.totalorder %s50, %s51
    %p65 = scmp.eq.s32.totalorder %s17, 1
    %p66 = por %p64, %p65
    %p68 = scmp.ne.s32.totalorder %s51, %s67
    %p69 = scmp.eq.s32.totalorder %s17, 0
    %p70 = por %p68, %p69
    %s72 = sadd.s32 %s71, 1
    %p75 = scmp.eq.s32.totalorder %s11, 1
    %p76 = scmp.ne.s32.totalorder %s71, %s73
    %p77 = scmp.eq.s32.totalorder %s11, 0
    %p78 = por %p76, %p77
    %p79 = scmp.ne.s32.totalorder %s71, %s73
    %p80 = scmp.eq.s32.totalorder %s16, 1
    %p81 = por %p79, %p80
    %p82 = scmp.ne.s32.totalorder %s73, %s74
    %p83 = scmp.eq.s32.totalorder %s16, 0
    %p84 = por %p82, %p83
    %p85 = scmp.ne.s32.totalorder %s73, %s74
    %p86 = scmp.eq.s32.totalorder %s17, 1
    %p87 = por %p85, %p86
    %p89 = scmp.ne.s32.totalorder %s74, %s88
    %p90 = scmp.eq.s32.totalorder %s17, 0
    %p91 = por %p89, %p90
    %s93 = sadd.s32 %s92, 1
    %p96 = scmp.eq.s32.totalorder %s11, 1
    %p97 = scmp.ne.s32.totalorder %s92, %s94
    %p98 = scmp.eq.s32.totalorder %s11, 0
    %p99 = por %p97, %p98
    %p100 = scmp.ne.s32.totalorder %s92, %s94
    %p101 = scmp.eq.s32.totalorder %s16, 1
    %p102 = por %p100, %p101
    %p103 = scmp.ne.s32.totalorder %s94, %s95
    %p104 = scmp.eq.s32.totalorder %s16, 0
    %p105 = por %p103, %p104
    %p106 = scmp.ne.s32.totalorder %s94, %s95
    %p107 = scmp.eq.s32.totalorder %s17, 1
    %p108 = por %p106, %p107
    %p110 = scmp.ne.s32.totalorder %s95, %s109
    %p111 = scmp.eq.s32.totalorder %s17, 0
    %p112 = por %p110, %p111
    %s113 = ssub.s32 %s11, %s18
    %p114 = scmp.eq.s32.totalorder %s113, 0
    %s116 = sadd.s32 %s115, 1
    %s117 = scalar_select %p114, %s115, %s116
    %p120 = pneg %p114
    %p121 = scmp.eq.s32.totalorder %s11, 1
    %p122 = por %p120, %p121
    %p123 = scmp.ne.s32.totalorder %s115, %s118
    %p124 = scmp.eq.s32.totalorder %s11, 0
    %p125 = por %p123, %p124
    %p126 = scmp.ne.s32.totalorder %s115, %s118
    %p127 = scmp.eq.s32.totalorder %s16, 1
    %p128 = por %p126, %p127
    %p129 = scmp.ne.s32.totalorder %s118, %s119
    %p130 = scmp.eq.s32.totalorder %s16, 0
    %p131 = por %p129, %p130
    %p132 = scmp.ne.s32.totalorder %s118, %s119
    %p133 = scmp.eq.s32.totalorder %s17, 1
    %p134 = por %p132, %p133
    %p136 = scmp.ne.s32.totalorder %s119, %s135
    %p137 = scmp.eq.s32.totalorder %s17, 0
    %p138 = por %p136, %p137
    %s139 = ssub.s32 %s11, %s18
    %p140 = scmp.eq.s32.totalorder %s139, 0
    %s142 = sadd.s32 %s141, 1
    %s143 = scalar_select %p140, %s141, %s142
    %p146 = pneg %p140
    %p147 = scmp.eq.s32.totalorder %s11, 1
    %p148 = por %p146, %p147
    %p149 = scmp.ne.s32.totalorder %s141, %s144
    %p150 = scmp.eq.s32.totalorder %s11, 0
    %p151 = por %p149, %p150
    %p152 = scmp.ne.s32.totalorder %s141, %s144
    %p153 = scmp.eq.s32.totalorder %s16, 1
    %p154 = por %p152, %p153
    %p155 = scmp.ne.s32.totalorder %s144, %s145
    %p156 = scmp.eq.s32.totalorder %s16, 0
    %p157 = por %p155, %p156
    %p158 = scmp.ne.s32.totalorder %s144, %s145
    %p159 = scmp.eq.s32.totalorder %s17, 1
    %p160 = por %p158, %p159
    %p162 = scmp.ne.s32.totalorder %s145, %s161
    %p163 = scmp.eq.s32.totalorder %s17, 0
    %p164 = por %p162, %p163
    %p165 = scmp.le.s32.totalorder 1, %s11
    %p166 = scmp.lt.s32.totalorder %s11, 3
    %p167 = pnand %p165, %p166
    %p168 = pneg %p167
    // Predicated region
    $region9: #{tpu_custom_call.1} parent=5 // pred_check
      _
    $region10: #{tpu_custom_call.1} parent=5 // pred_check_branch
      %170 = sbr.rel (%p167) target = $region12
    $region11: #{tpu_custom_call.1} parent=5 // pred_region
      %s171 = ssub.s32 %s11, 1
      // Predicated region
      $region13: #{tpu_custom_call.1} parent=11 // pred_check
        %p172 = pneg %p84
      $region14: #{tpu_custom_call.1} parent=11 // pred_check_branch
        %174 = sbr.rel (%p172) target = $region16
      $region15: #{tpu_custom_call.1} parent=11 // pred_region
        _
      $region16: #{tpu_custom_call.1} parent=11 // pred_fallthru
        _
      // Predicated region
      $region17: #{tpu_custom_call.1} parent=11 // pred_check
        %p175 = pneg %p105
      $region18: #{tpu_custom_call.1} parent=11 // pred_check_branch
        %177 = sbr.rel (%p175) target = $region20
      $region19: #{tpu_custom_call.1} parent=11 // pred_region
        _
      $region20: #{tpu_custom_call.1} parent=11 // pred_fallthru
        _
    $region12: #{tpu_custom_call.1} parent=5 // pred_fallthru
      _
    %p178 = scmp.lt.s32.totalorder %s11, 2
    // Predicated region
    $region21: #{tpu_custom_call.1} parent=5 // pred_check
      %p179 = pneg %p178
    $region22: #{tpu_custom_call.1} parent=5 // pred_check_branch
      %181 = sbr.rel (%p179) target = $region24
    $region23: #{tpu_custom_call.1} parent=5 // pred_region
      // Predicated region
      $region25: #{tpu_custom_call.1} parent=23 // pred_check
        %p182 = pneg %p31
      $region26: #{tpu_custom_call.1} parent=23 // pred_check_branch
        %184 = sbr.rel (%p182) target = $region28
      $region27: #{tpu_custom_call.1} parent=23 // pred_region
        %p185 = scmp.lt.s32.totalorder %s11, 1
        %s186 = scalar_select %p185, %s11, 1
        %s187 = smul.addr %s186, 8
        %s188 = scalar_lea.vmem %s0, %s187
      $region28: #{tpu_custom_call.1} parent=23 // pred_fallthru
        _
      // Predicated region
      $region29: #{tpu_custom_call.1} parent=23 // pred_check
        %p189 = pneg %p57
      $region30: #{tpu_custom_call.1} parent=23 // pred_check_branch
        %191 = sbr.rel (%p189) target = $region32
      $region31: #{tpu_custom_call.1} parent=23 // pred_region
        %p192 = scmp.lt.s32.totalorder %s11, 1
        %s193 = scalar_select %p192, %s11, 1
        %s194 = scalar_lea.vmem %s1, %s193
      $region32: #{tpu_custom_call.1} parent=23 // pred_fallthru
        _
      // Predicated region
      $region33: #{tpu_custom_call.1} parent=23 // pred_check
        %p195 = pneg %p125
      $region34: #{tpu_custom_call.1} parent=23 // pred_check_branch
        %197 = sbr.rel (%p195) target = $region36
      $region35: #{tpu_custom_call.1} parent=23 // pred_region
        %p198 = scmp.lt.s32.totalorder %s11, 1
        %s199 = scalar_select %p198, %s11, 1
        %s200 = smul.addr %s199, 2
        %s201 = smul.addr %s200, 8
        %s202 = scalar_lea.vmem %s4, %s201
      $region36: #{tpu_custom_call.1} parent=23 // pred_fallthru
        _
    $region24: #{tpu_custom_call.1} parent=5 // pred_fallthru
      _
    %p203 = scmp.le.s32.totalorder 1, %s11
    %p204 = scmp.lt.s32.totalorder %s11, 3
    %p205 = pnand %p203, %p204
    %p206 = pneg %p205
    // Predicated region
    $region37: #{tpu_custom_call.1} parent=5 // pred_check
      _
    $region38: #{tpu_custom_call.1} parent=5 // pred_check_branch
      %208 = sbr.rel (%p205) target = $region40
    $region39: #{tpu_custom_call.1} parent=5 // pred_region
      %s209 = ssub.s32 %s11, 1
      %p210 = scmp.lt.s32.totalorder %s16, 1
      %s211 = scalar_select %p210, %s16, 1
      %s212 = smul.addr %s211, 8
      %s213 = scalar_lea.vmem %s0, %s212
      %p214 = pneg %p37
      %p215 = pneg %p34
      %p216 = scmp.lt.s32.totalorder %s16, 1
      %s217 = scalar_select %p216, %s16, 1
      %s218 = scalar_lea.vmem %s1, %s217
      %p219 = pneg %p63
      %p220 = pneg %p60
      %p221 = pneg %p84
      %p222 = pneg %p81
      %p223 = pneg %p105
      %p224 = pneg %p102
      %p225 = scmp.lt.s32.totalorder %s16, 1
      %s226 = scalar_select %p225, %s16, 1
      %s227 = smul.addr %s226, 2
      %s228 = smul.addr %s227, 8
      %s229 = scalar_lea.vmem %s4, %s228
      %p230 = pneg %p131
      %p231 = pneg %p128
      %p232 = pneg %p157
      %p233 = pneg %p154
      %p234 = scmp.lt.s32.totalorder %s16, 1
      %s235 = scalar_select %p234, %s16, 1
      %s236 = smul.addr %s235, 2
      %s237 = smul.addr %s236, 8
      %s238 = scalar_lea.vmem %s5, %s237
      %p239 = scmp.lt.s32.totalorder %s16, 1
      %s240 = scalar_select %p239, %s16, 1
      %s241 = smul.addr %s240, 8
      %s242 = scalar_lea.vmem %s0, %s241
      %p243 = scmp.lt.s32.totalorder %s16, 1
      %s244 = scalar_select %p243, %s16, 1
      %s245 = scalar_lea.vmem %s1, %s244
      %p246 = scmp.lt.s32.totalorder %s16, 1
      %s247 = scalar_select %p246, %s16, 1
      %s248 = smul.addr %s247, 2
      %s249 = smul.addr %s248, 8
      %s250 = scalar_lea.vmem %s4, %s249
      %p251 = scmp.lt.s32.totalorder %s16, 1
      %s252 = scalar_select %p251, %s16, 1
      %s253 = smul.addr %s252, 2
      %s254 = smul.addr %s253, 8
      %s255 = scalar_lea.vmem %s5, %s254
      %v256 = vld [vmem:[%s2] sm:$0xff]
      %v257 = vld [vmem:[%s2 + $0x8] sm:$0xff]
      %v258 = vld [vmem:[%s242] sm:$0xff]
      %v259 = vld [vmem:[%s3] sm:$0xff]
      %v260 = vld [vmem:[%s3 + $0x8] sm:$0xff]
      %262 = vset.pattern.permute.xlu0 0
      %263 = vperm.xlu0 %262, %v259
      %v264 = vpop.permute.xlu0 %263
      %267 = vset.pattern.permute.xlu0 0
      %268 = vperm.xlu0 %267, %v260
      %v269 = vpop.permute.xlu0 %268
      %vm271 = vcmask 261120
      %v273 = vsel %vm271, %v256, 0
      %v276 = vsel %vm271, %v257, 0
      %v279 = vsel %vm271, %v258, 0
      %281 = vmatprep.subr.mxu0 0.0
      %282 = vmatpush1.xpose.msra.mxu0 0.0
      %283 = vmatprep.subr.mxu0 0.0
      %284 = vmatpush1.xpose.msra.mxu0 0.0
      %285 = vmatprep.subr.mxu0 0.0
      %286 = vmatpush1.xpose.msra.mxu0 0.0
      %287 = vmatprep.subr.mxu0 0.0
      %288 = vmatpush1.xpose.msra.mxu0 0.0
      %289 = vmatprep.subr.mxu0 0.0
      %290 = vmatpush1.xpose.msra.mxu0 0.0
      %291 = vmatprep.subr.mxu0 0.0
      %292 = vmatpush1.xpose.msra.mxu0 0.0
      %293 = vmatprep.subr.mxu0 0.0
      %294 = vmatpush1.xpose.msra.mxu0 0.0
      %295 = vmatprep.subr.mxu0 0.0
      %296 = vmatpush1.xpose.msra.mxu0 0.0
      %297 = vmatprep.subr.mxu0 0.0
      %298 = vmatpush1.xpose.msra.mxu0 0.0
      %299 = vmatprep.subr.mxu0 0.0
      %300 = vmatpush1.xpose.msra.mxu0 0.0
      %301 = vmatprep.subr.mxu0 0.0
      %302 = vmatpush1.xpose.msra.mxu0 0.0
      %303 = vmatprep.subr.mxu0 0.0
      %304 = vmatpush1.xpose.msra.mxu0 0.0
      %305 = vmatprep.subr.mxu0 0.0
      %306 = vmatpush1.xpose.msra.mxu0 0.0
      %307 = vmatprep.subr.mxu0 0.0
      %308 = vmatpush1.xpose.msra.mxu0 0.0
      %309 = vmatprep.subr.mxu0 0.0
      %310 = vmatpush1.xpose.msra.mxu0 0.0
      %311 = vmatprep.subr.mxu0 0.0
      %312 = vmatpush1.xpose.msra.mxu0 %v279
      %313 = vmatprep.subr.mxu0 0.0
      %314 = vmatpush2.xpose.msra.mxu0 0.0
      %315 = vmatprep.subr.mxu0 0.0
      %316 = vmatpush2.xpose.msra.mxu0 0.0
      %317 = vmatprep.subr.mxu0 0.0
      %318 = vmatpush2.xpose.msra.mxu0 0.0
      %319 = vmatprep.subr.mxu0 0.0
      %320 = vmatpush2.xpose.msra.mxu0 0.0
      %321 = vmatprep.subr.mxu0 0.0
      %322 = vmatpush2.xpose.msra.mxu0 0.0
      %323 = vmatprep.subr.mxu0 0.0
      %324 = vmatpush2.xpose.msra.mxu0 0.0
      %325 = vmatprep.subr.mxu0 0.0
      %326 = vmatpush2.xpose.msra.mxu0 0.0
      %327 = vmatprep.subr.mxu0 0.0
      %328 = vmatpush2.xpose.msra.mxu0 0.0
      %329 = vmatprep.subr.mxu0 0.0
      %330 = vmatpush2.xpose.msra.mxu0 0.0
      %331 = vmatprep.subr.mxu0 0.0
      %332 = vmatpush2.xpose.msra.mxu0 0.0
      %333 = vmatprep.subr.mxu0 0.0
      %334 = vmatpush2.xpose.msra.mxu0 0.0
      %335 = vmatprep.subr.mxu0 0.0
      %336 = vmatpush2.xpose.msra.mxu0 0.0
      %337 = vmatprep.subr.mxu0 0.0
      %338 = vmatpush2.xpose.msra.mxu0 0.0
      %339 = vmatprep.subr.mxu0 0.0
      %340 = vmatpush2.xpose.msra.mxu0 0.0
      %341 = vmatprep.subr.mxu0 0.0
      %342 = vmatpush2.xpose.msra.mxu0 0.0
      %343 = vmatprep.subr.mxu0 0.0
      %344 = vmatpush2.xpose.msra.mxu0 0.0
      %345 = vmatprep.mubr.f32.mxu0 0.0
      %346 = vmatmul.mubr.f32.gmra.mxu0 %v273
      %v347 = vpop.f32.mrf.mxu0
      %v348 = vadd.f32 %v264, %v347
      %v349 = vpop.f32.mrf.mxu0
      %350 = vmatprep.mubr.f32.mxu0 0.0
      %351 = vmatmul.mubr.f32.gmra.mxu0 %v276
      %v352 = vpop.f32.mrf.mxu0
      %v353 = vadd.f32 %v269, %v352
      %v354 = vpop.f32.mrf.mxu0
      %355 = vdwg.mxu0
      %v356 = vld [vmem:[%s250] sm:$0xff]
      %v357 = vld [vmem:[%s250 + $0x8] sm:$0xff]
      %v358 = vadd.f32 %v348, %v356
      %v359 = vadd.f32 %v353, %v357
      %v360 = vld [vmem:[%s245] sm:$0x1]
      %v361 = vlaneseq
      %v362 = vshrl.u32 %v361, 7
      %v363 = vadd.s32 %v362, 8
      %v364 = vlaneseq
      %v365 = vshrl.u32 %v364, 7
      %v366 = vsub.s32 0, %v365
      %v367 = vrot.slane %v358, %v366
      %vm368 = vcmp.gt.f32.partialorder %v367, %v358
      %vm369 = vcmp.gt.f32.partialorder %v367, %v359
      %vm370 = vcmp.eq.f32.partialorder %v367, %v358
      %vm371 = vcmp.eq.f32.partialorder %v367, %v359
      %vm372 = vcmp.gt.s32.totalorder %v362, 0
      %vm373 = vcmp.gt.s32.totalorder %v363, 0
      %v374 = vsel %vm372, 1, 0
      %v375 = vsel %vm373, 1, 0
      %vm376 = vcmp.eq.s32.totalorder %v374, 1
      %vm377 = vcmp.eq.s32.totalorder %v375, 1
      %vm378 = vmand %vm370, %vm376
      %vm379 = vmand %vm371, %vm377
      %vm380 = vmor %vm368, %vm378
      %vm381 = vmor %vm369, %vm379
      %v382 = vsel %vm380, 1, 0
      %v383 = vsel %vm381, 1, 0
      %v384 = vlaneseq
      %v385 = vshrl.u32 %v384, 7
      %v386 = vsub.s32 1, %v385
      %v387 = vrot.slane %v358, %v386
      %vm388 = vcmp.gt.f32.partialorder %v387, %v358
      %vm389 = vcmp.gt.f32.partialorder %v387, %v359
      %vm390 = vcmp.eq.f32.partialorder %v387, %v358
      %vm391 = vcmp.eq.f32.partialorder %v387, %v359
      %vm392 = vcmp.gt.s32.totalorder %v362, 1
      %vm393 = vcmp.gt.s32.totalorder %v363, 1
      %v394 = vsel %vm392, 1, 0
      %v395 = vsel %vm393, 1, 0
      %vm396 = vcmp.eq.s32.totalorder %v394, 1
      %vm397 = vcmp.eq.s32.totalorder %v395, 1
      %vm398 = vmand %vm390, %vm396
      %vm399 = vmand %vm391, %vm397
      %vm400 = vmor %vm388, %vm398
      %vm401 = vmor %vm389, %vm399
      %v402 = vsel %vm400, 1, 0
      %v403 = vsel %vm401, 1, 0
      %v404 = vadd.s32 %v382, %v402
      %v405 = vadd.s32 %v383, %v403
      %v406 = vlaneseq
      %v407 = vshrl.u32 %v406, 7
      %v408 = vsub.s32 2, %v407
      %v409 = vrot.slane %v358, %v408
      %vm410 = vcmp.gt.f32.partialorder %v409, %v358
      %vm411 = vcmp.gt.f32.partialorder %v409, %v359
      %vm412 = vcmp.eq.f32.partialorder %v409, %v358
      %vm413 = vcmp.eq.f32.partialorder %v409, %v359
      %vm414 = vcmp.gt.s32.totalorder %v362, 2
      %vm415 = vcmp.gt.s32.totalorder %v363, 2
      %v416 = vsel %vm414, 1, 0
      %v417 = vsel %vm415, 1, 0
      %vm418 = vcmp.eq.s32.totalorder %v416, 1
      %vm419 = vcmp.eq.s32.totalorder %v417, 1
      %vm420 = vmand %vm412, %vm418
      %vm421 = vmand %vm413, %vm419
      %vm422 = vmor %vm410, %vm420
      %vm423 = vmor %vm411, %vm421
      %v424 = vsel %vm422, 1, 0
      %v425 = vsel %vm423, 1, 0
      %v426 = vadd.s32 %v404, %v424
      %v427 = vadd.s32 %v405, %v425
      %v428 = vlaneseq
      %v429 = vshrl.u32 %v428, 7
      %v430 = vsub.s32 3, %v429
      %v431 = vrot.slane %v358, %v430
      %vm432 = vcmp.gt.f32.partialorder %v431, %v358
      %vm433 = vcmp.gt.f32.partialorder %v431, %v359
      %vm434 = vcmp.eq.f32.partialorder %v431, %v358
      %vm435 = vcmp.eq.f32.partialorder %v431, %v359
      %vm436 = vcmp.gt.s32.totalorder %v362, 3
      %vm437 = vcmp.gt.s32.totalorder %v363, 3
      %v438 = vsel %vm436, 1, 0
      %v439 = vsel %vm437, 1, 0
      %vm440 = vcmp.eq.s32.totalorder %v438, 1
      %vm441 = vcmp.eq.s32.totalorder %v439, 1
      %vm442 = vmand %vm434, %vm440
      %vm443 = vmand %vm435, %vm441
      %vm444 = vmor %vm432, %vm442
      %vm445 = vmor %vm433, %vm443
      %v446 = vsel %vm444, 1, 0
      %v447 = vsel %vm445, 1, 0
      %v448 = vadd.s32 %v426, %v446
      %v449 = vadd.s32 %v427, %v447
      %v450 = vlaneseq
      %v451 = vshrl.u32 %v450, 7
      %v452 = vsub.s32 4, %v451
      %v453 = vrot.slane %v358, %v452
      %vm454 = vcmp.gt.f32.partialorder %v453, %v358
      %vm455 = vcmp.gt.f32.partialorder %v453, %v359
      %vm456 = vcmp.eq.f32.partialorder %v453, %v358
      %vm457 = vcmp.eq.f32.partialorder %v453, %v359
      %vm458 = vcmp.gt.s32.totalorder %v362, 4
      %vm459 = vcmp.gt.s32.totalorder %v363, 4
      %v460 = vsel %vm458, 1, 0
      %v461 = vsel %vm459, 1, 0
      %vm462 = vcmp.eq.s32.totalorder %v460, 1
      %vm463 = vcmp.eq.s32.totalorder %v461, 1
      %vm464 = vmand %vm456, %vm462
      %vm465 = vmand %vm457, %vm463
      %vm466 = vmor %vm454, %vm464
      %vm467 = vmor %vm455, %vm465
      %v468 = vsel %vm466, 1, 0
      %v469 = vsel %vm467, 1, 0
      %v470 = vadd.s32 %v448, %v468
      %v471 = vadd.s32 %v449, %v469
      %v472 = vlaneseq
      %v473 = vshrl.u32 %v472, 7
      %v474 = vsub.s32 5, %v473
      %v475 = vrot.slane %v358, %v474
      %vm476 = vcmp.gt.f32.partialorder %v475, %v358
      %vm477 = vcmp.gt.f32.partialorder %v475, %v359
      %vm478 = vcmp.eq.f32.partialorder %v475, %v358
      %vm479 = vcmp.eq.f32.partialorder %v475, %v359
      %vm480 = vcmp.gt.s32.totalorder %v362, 5
      %vm481 = vcmp.gt.s32.totalorder %v363, 5
      %v482 = vsel %vm480, 1, 0
      %v483 = vsel %vm481, 1, 0
      %vm484 = vcmp.eq.s32.totalorder %v482, 1
      %vm485 = vcmp.eq.s32.totalorder %v483, 1
      %vm486 = vmand %vm478, %vm484
      %vm487 = vmand %vm479, %vm485
      %vm488 = vmor %vm476, %vm486
      %vm489 = vmor %vm477, %vm487
      %v490 = vsel %vm488, 1, 0
      %v491 = vsel %vm489, 1, 0
      %v492 = vadd.s32 %v470, %v490
      %v493 = vadd.s32 %v471, %v491
      %v494 = vlaneseq
      %v495 = vshrl.u32 %v494, 7
      %v496 = vsub.s32 6, %v495
      %v497 = vrot.slane %v358, %v496
      %vm498 = vcmp.gt.f32.partialorder %v497, %v358
      %vm499 = vcmp.gt.f32.partialorder %v497, %v359
      %vm500 = vcmp.eq.f32.partialorder %v497, %v358
      %vm501 = vcmp.eq.f32.partialorder %v497, %v359
      %vm502 = vcmp.gt.s32.totalorder %v362, 6
      %vm503 = vcmp.gt.s32.totalorder %v363, 6
      %v504 = vsel %vm502, 1, 0
      %v505 = vsel %vm503, 1, 0
      %vm506 = vcmp.eq.s32.totalorder %v504, 1
      %vm507 = vcmp.eq.s32.totalorder %v505, 1
      %vm508 = vmand %vm500, %vm506
      %vm509 = vmand %vm501, %vm507
      %vm510 = vmor %vm498, %vm508
      %vm511 = vmor %vm499, %vm509
      %v512 = vsel %vm510, 1, 0
      %v513 = vsel %vm511, 1, 0
      %v514 = vadd.s32 %v492, %v512
      %v515 = vadd.s32 %v493, %v513
      %v516 = vlaneseq
      %v517 = vshrl.u32 %v516, 7
      %v518 = vsub.s32 7, %v517
      %v519 = vrot.slane %v358, %v518
      %vm520 = vcmp.gt.f32.partialorder %v519, %v358
      %vm521 = vcmp.gt.f32.partialorder %v519, %v359
      %vm522 = vcmp.eq.f32.partialorder %v519, %v358
      %vm523 = vcmp.eq.f32.partialorder %v519, %v359
      %vm524 = vcmp.gt.s32.totalorder %v362, 7
      %vm525 = vcmp.gt.s32.totalorder %v363, 7
      %v526 = vsel %vm524, 1, 0
      %v527 = vsel %vm525, 1, 0
      %vm528 = vcmp.eq.s32.totalorder %v526, 1
      %vm529 = vcmp.eq.s32.totalorder %v527, 1
      %vm530 = vmand %vm522, %vm528
      %vm531 = vmand %vm523, %vm529
      %vm532 = vmor %vm520, %vm530
      %vm533 = vmor %vm521, %vm531
      %v534 = vsel %vm532, 1, 0
      %v535 = vsel %vm533, 1, 0
      %v536 = vadd.s32 %v514, %v534
      %v537 = vadd.s32 %v515, %v535
      %v538 = vlaneseq
      %v539 = vshrl.u32 %v538, 7
      %v540 = vsub.s32 0, %v539
      %v541 = vrot.slane %v359, %v540
      %vm542 = vcmp.gt.f32.partialorder %v541, %v358
      %vm543 = vcmp.gt.f32.partialorder %v541, %v359
      %vm544 = vcmp.eq.f32.partialorder %v541, %v358
      %vm545 = vcmp.eq.f32.partialorder %v541, %v359
      %vm546 = vcmp.gt.s32.totalorder %v362, 8
      %vm547 = vcmp.gt.s32.totalorder %v363, 8
      %v548 = vsel %vm546, 1, 0
      %v549 = vsel %vm547, 1, 0
      %vm550 = vcmp.eq.s32.totalorder %v548, 1
      %vm551 = vcmp.eq.s32.totalorder %v549, 1
      %vm552 = vmand %vm544, %vm550
      %vm553 = vmand %vm545, %vm551
      %vm554 = vmor %vm542, %vm552
      %vm555 = vmor %vm543, %vm553
      %v556 = vsel %vm554, 1, 0
      %v557 = vsel %vm555, 1, 0
      %v558 = vadd.s32 %v536, %v556
      %v559 = vadd.s32 %v537, %v557
      %v560 = vlaneseq
      %v561 = vshrl.u32 %v560, 7
      %v562 = vsub.s32 1, %v561
      %v563 = vrot.slane %v359, %v562
      %vm564 = vcmp.gt.f32.partialorder %v563, %v358
      %vm565 = vcmp.gt.f32.partialorder %v563, %v359
      %vm566 = vcmp.eq.f32.partialorder %v563, %v358
      %vm567 = vcmp.eq.f32.partialorder %v563, %v359
      %vm568 = vcmp.gt.s32.totalorder %v362, 9
      %vm569 = vcmp.gt.s32.totalorder %v363, 9
      %v570 = vsel %vm568, 1, 0
      %v571 = vsel %vm569, 1, 0
      %vm572 = vcmp.eq.s32.totalorder %v570, 1
      %vm573 = vcmp.eq.s32.totalorder %v571, 1
      %vm574 = vmand %vm566, %vm572
      %vm575 = vmand %vm567, %vm573
      %vm576 = vmor %vm564, %vm574
      %vm577 = vmor %vm565, %vm575
      %v578 = vsel %vm576, 1, 0
      %v579 = vsel %vm577, 1, 0
      %v580 = vadd.s32 %v558, %v578
      %v581 = vadd.s32 %v559, %v579
      %v582 = vlaneseq
      %v583 = vshrl.u32 %v582, 7
      %v584 = vsub.s32 2, %v583
      %v585 = vrot.slane %v359, %v584
      %vm586 = vcmp.gt.f32.partialorder %v585, %v358
      %vm587 = vcmp.gt.f32.partialorder %v585, %v359
      %vm588 = vcmp.eq.f32.partialorder %v585, %v358
      %vm589 = vcmp.eq.f32.partialorder %v585, %v359
      %vm590 = vcmp.gt.s32.totalorder %v362, 10
      %vm591 = vcmp.gt.s32.totalorder %v363, 10
      %v592 = vsel %vm590, 1, 0
      %v593 = vsel %vm591, 1, 0
      %vm594 = vcmp.eq.s32.totalorder %v592, 1
      %vm595 = vcmp.eq.s32.totalorder %v593, 1
      %vm596 = vmand %vm588, %vm594
      %vm597 = vmand %vm589, %vm595
      %vm598 = vmor %vm586, %vm596
      %vm599 = vmor %vm587, %vm597
      %v600 = vsel %vm598, 1, 0
      %v601 = vsel %vm599, 1, 0
      %v602 = vadd.s32 %v580, %v600
      %v603 = vadd.s32 %v581, %v601
      %v604 = vlaneseq
      %v605 = vshrl.u32 %v604, 7
      %v606 = vsub.s32 3, %v605
      %v607 = vrot.slane %v359, %v606
      %vm608 = vcmp.gt.f32.partialorder %v607, %v358
      %vm609 = vcmp.gt.f32.partialorder %v607, %v359
      %vm610 = vcmp.eq.f32.partialorder %v607, %v358
      %vm611 = vcmp.eq.f32.partialorder %v607, %v359
      %vm612 = vcmp.gt.s32.totalorder %v362, 11
      %vm613 = vcmp.gt.s32.totalorder %v363, 11
      %v614 = vsel %vm612, 1, 0
      %v615 = vsel %vm613, 1, 0
      %vm616 = vcmp.eq.s32.totalorder %v614, 1
      %vm617 = vcmp.eq.s32.totalorder %v615, 1
      %vm618 = vmand %vm610, %vm616
      %vm619 = vmand %vm611, %vm617
      %vm620 = vmor %vm608, %vm618
      %vm621 = vmor %vm609, %vm619
      %v622 = vsel %vm620, 1, 0
      %v623 = vsel %vm621, 1, 0
      %v624 = vadd.s32 %v602, %v622
      %v625 = vadd.s32 %v603, %v623
      %v626 = vlaneseq
      %v627 = vshrl.u32 %v626, 7
      %v628 = vsub.s32 4, %v627
      %v629 = vrot.slane %v359, %v628
      %vm630 = vcmp.gt.f32.partialorder %v629, %v358
      %vm631 = vcmp.gt.f32.partialorder %v629, %v359
      %vm632 = vcmp.eq.f32.partialorder %v629, %v358
      %vm633 = vcmp.eq.f32.partialorder %v629, %v359
      %vm634 = vcmp.gt.s32.totalorder %v362, 12
      %vm635 = vcmp.gt.s32.totalorder %v363, 12
      %v636 = vsel %vm634, 1, 0
      %v637 = vsel %vm635, 1, 0
      %vm638 = vcmp.eq.s32.totalorder %v636, 1
      %vm639 = vcmp.eq.s32.totalorder %v637, 1
      %vm640 = vmand %vm632, %vm638
      %vm641 = vmand %vm633, %vm639
      %vm642 = vmor %vm630, %vm640
      %vm643 = vmor %vm631, %vm641
      %v644 = vsel %vm642, 1, 0
      %v645 = vsel %vm643, 1, 0
      %v646 = vadd.s32 %v624, %v644
      %v647 = vadd.s32 %v625, %v645
      %v648 = vlaneseq
      %v649 = vshrl.u32 %v648, 7
      %v650 = vsub.s32 5, %v649
      %v651 = vrot.slane %v359, %v650
      %vm652 = vcmp.gt.f32.partialorder %v651, %v358
      %vm653 = vcmp.gt.f32.partialorder %v651, %v359
      %vm654 = vcmp.eq.f32.partialorder %v651, %v358
      %vm655 = vcmp.eq.f32.partialorder %v651, %v359
      %vm656 = vcmp.gt.s32.totalorder %v362, 13
      %vm657 = vcmp.gt.s32.totalorder %v363, 13
      %v658 = vsel %vm656, 1, 0
      %v659 = vsel %vm657, 1, 0
      %vm660 = vcmp.eq.s32.totalorder %v658, 1
      %vm661 = vcmp.eq.s32.totalorder %v659, 1
      %vm662 = vmand %vm654, %vm660
      %vm663 = vmand %vm655, %vm661
      %vm664 = vmor %vm652, %vm662
      %vm665 = vmor %vm653, %vm663
      %v666 = vsel %vm664, 1, 0
      %v667 = vsel %vm665, 1, 0
      %v668 = vadd.s32 %v646, %v666
      %v669 = vadd.s32 %v647, %v667
      %v670 = vlaneseq
      %v671 = vshrl.u32 %v670, 7
      %v672 = vsub.s32 6, %v671
      %v673 = vrot.slane %v359, %v672
      %vm674 = vcmp.gt.f32.partialorder %v673, %v358
      %vm675 = vcmp.gt.f32.partialorder %v673, %v359
      %vm676 = vcmp.eq.f32.partialorder %v673, %v358
      %vm677 = vcmp.eq.f32.partialorder %v673, %v359
      %vm678 = vcmp.gt.s32.totalorder %v362, 14
      %vm679 = vcmp.gt.s32.totalorder %v363, 14
      %v680 = vsel %vm678, 1, 0
      %v681 = vsel %vm679, 1, 0
      %vm682 = vcmp.eq.s32.totalorder %v680, 1
      %vm683 = vcmp.eq.s32.totalorder %v681, 1
      %vm684 = vmand %vm676, %vm682
      %vm685 = vmand %vm677, %vm683
      %vm686 = vmor %vm674, %vm684
      %vm687 = vmor %vm675, %vm685
      %v688 = vsel %vm686, 1, 0
      %v689 = vsel %vm687, 1, 0
      %v690 = vadd.s32 %v668, %v688
      %v691 = vadd.s32 %v669, %v689
      %v692 = vlaneseq
      %v693 = vshrl.u32 %v692, 7
      %v694 = vsub.s32 7, %v693
      %v695 = vrot.slane %v359, %v694
      %vm696 = vcmp.gt.f32.partialorder %v695, %v358
      %vm697 = vcmp.gt.f32.partialorder %v695, %v359
      %vm698 = vcmp.eq.f32.partialorder %v695, %v358
      %vm699 = vcmp.eq.f32.partialorder %v695, %v359
      %vm700 = vcmp.gt.s32.totalorder %v362, 15
      %vm701 = vcmp.gt.s32.totalorder %v363, 15
      %v702 = vsel %vm700, 1, 0
      %v703 = vsel %vm701, 1, 0
      %vm704 = vcmp.eq.s32.totalorder %v702, 1
      %vm705 = vcmp.eq.s32.totalorder %v703, 1
      %vm706 = vmand %vm698, %vm704
      %vm707 = vmand %vm699, %vm705
      %vm708 = vmor %vm696, %vm706
      %vm709 = vmor %vm697, %vm707
      %v710 = vsel %vm708, 1, 0
      %v711 = vsel %vm709, 1, 0
      %v712 = vadd.s32 %v690, %v710
      %v713 = vadd.s32 %v691, %v711
      %v714 = vlaneseq
      %v715 = vshrl.u32 %v714, 7
      %v716 = vsub.s32 0, %v715
      %v717 = vrot.slane %v360, %v716
      %vm718 = vcmp.lt.s32.totalorder %v712, %v717
      %vm719 = vcmp.lt.s32.totalorder %v713, %v717
      %v720 = vsel %vm718, 1, 0
      %v721 = vsel %vm719, 1, 0
      %v722 = vcvt.s32.f32 %v720
      %v723 = vcvt.s32.f32 %v721
      %vm724 = vcmask 64512
      %725 = vst.msk [vmem:[%s255] sm:$0xff] %vm724, %v722
      %726 = vst.msk [vmem:[%s255 + $0x8] sm:$0xff] %vm724, %v723
      %p727 = scmp.lt.s32.totalorder %s16, 1
      %s728 = scalar_select %p727, %s16, 1
      %s729 = smul.addr %s728, 2
      %s730 = smul.addr %s729, 8
      %s731 = scalar_lea.vmem %s5, %s730
      // Predicated region
      $region41: #{tpu_custom_call.1} parent=39 // pred_check
        %p732 = pneg %p154
      $region42: #{tpu_custom_call.1} parent=39 // pred_check_branch
        %734 = sbr.rel (%p732) target = $region44
      $region43: #{tpu_custom_call.1} parent=39 // pred_region
        _
      $region44: #{tpu_custom_call.1} parent=39 // pred_fallthru
        _
    $region40: #{tpu_custom_call.1} parent=5 // pred_fallthru
      _
    %p735 = scmp.le.s32.totalorder 2, %s11
    // Predicated region
    $region45: #{tpu_custom_call.1} parent=5 // pred_check
      %p736 = pneg %p735
    $region46: #{tpu_custom_call.1} parent=5 // pred_check_branch
      %738 = sbr.rel (%p736) target = $region48
    $region47: #{tpu_custom_call.1} parent=5 // pred_region
      %s739 = ssub.s32 %s11, 2
      // Predicated region
      $region49: #{tpu_custom_call.1} parent=47 // pred_check
        %p740 = pneg %p160
      $region50: #{tpu_custom_call.1} parent=47 // pred_check_branch
        %742 = sbr.rel (%p740) target = $region52
      $region51: #{tpu_custom_call.1} parent=47 // pred_region
        %p743 = scmp.lt.s32.totalorder %s17, 1
        %s744 = scalar_select %p743, %s17, 1
        %s745 = smul.addr %s744, 2
        %s746 = smul.addr %s745, 8
        %s747 = scalar_lea.vmem %s5, %s746
      $region52: #{tpu_custom_call.1} parent=47 // pred_fallthru
        _
    $region48: #{tpu_custom_call.1} parent=5 // pred_fallthru
      _
  $region6: #{tpu_custom_call.1} parent=0 // loop_footer
    %s15 = sadd.s32 1, %s11
  $region7: #{tpu_custom_call.1} parent=0 // loop_footer_branch
    %10 = sbr.rel target = $region3
  $region8: #{tpu_custom_call.1} parent=0 // loop_exit
    _

</llo_original>
